<compile_context>
chip_gen: v7x
topology: tpu7x:2x2x1
jax: 0.10.0
libtpu: 0.0.40
codegen_flags: <defaults>
</compile_context>

<pallas_src>
import math

import jax
import jax.numpy as jnp
from jax.experimental import pallas as pl
from jax.experimental.pallas import tpu as pltpu


def _sap_kernel(x_ref, w_ref, out_ref):
    """One block of Bblk batch elements per grid step.

    x_ref:  (Bblk, T, D)  VMEM  (native dtype, no f32 copy)
    w_ref:  (1, D)        VMEM  (nn.Linear(D, 1).weight, PyTorch layout)
    out_ref:(Bblk, D)     VMEM
    """
    x = x_ref[...]                               # (Bblk, T, D), native dtype
    w = w_ref[...].astype(x.dtype)               # (1, D)

    # logits[b, t] = sum_d x[b, t, d] * w[d]   (bias dropped: softmax is
    # shift-invariant).  VPU multiply + XLU lane reduction over D with f32
    # accumulation; avoids a lane-sparse (T, 1) MXU matvec.
    logits = jnp.sum(x * w, axis=-1, dtype=jnp.float32)          # (Bblk, T)

    # Numerically-stable softmax over T (lane-axis reductions).
    m = jnp.max(logits, axis=-1, keepdims=True)                  # (Bblk, 1)
    e = jnp.exp(logits - m)                                      # (Bblk, T)
    s = jnp.sum(e, axis=-1, keepdims=True)                       # (Bblk, 1)
    attn = e * pl.reciprocal(s, approx=True)                     # (Bblk, T)

    # Attention-weighted sum over time on the MXU: batched (1,T)x(T,D)
    # contractions, f32 accumulation, x stays in its native dtype.
    out = jnp.einsum('bqt,btd->bqd',
                     attn[:, None, :].astype(x.dtype), x,
                     preferred_element_type=jnp.float32)         # (Bblk, 1, D)
    out_ref[...] = out[:, 0, :].astype(out_ref.dtype)


def _vmem_capacity_bytes():
    try:
        return int(pltpu.get_tpu_info().vmem_capacity_bytes)
    except Exception:
        return 64 * 1024 * 1024   # conservative (v7x per-TC VMEM)


def _pick_block_b(B, T, D, itemsize, budget_bytes):
    """How many batch elements to fold into one (Bblk, T, D) tile."""
    per_elem = max(T * D * itemsize, 1)
    fit = max(budget_bytes // per_elem, 1)       # elems per tile by VMEM budget
    if fit >= B:
        if B >= 16:
            # Split so the "parallel" grid axis has >= 2 steps (2 TCs on v7x),
            # keeping blocks multiples of 8 for sublane-aligned output stores.
            return max((((B + 1) // 2) // 8) * 8, 8)
        return B                                  # whole batch in one tile
    if fit >= 8:
        return (fit // 8) * 8                     # sublane-aligned block
    # TODO(synk): single batch element near/over the VMEM budget -> needs the
    # T-tiling online-softmax path; fall back to tiny blocks for now.
    return max(fit, 1)


def self_attention_pooling(x, w, b=None, *, block_b=None):
    """x: (B, T, D); w: (1, D) = nn.Linear(D, 1).weight; b: (1,) = bias.

    The bias is accepted for API parity but is a no-op under softmax
    (shift invariance), so it is not plumbed into the kernel.
    """
    B, T, D = x.shape
    assert w.shape == (1, D)
    del b

    # Generation-aware per-buffer tile budget (v7x: 64 MiB VMEM; v5e/v6e: 128).
    vmem = _vmem_capacity_bytes()
    budget = min(max(vmem // 12, 2 * 1024 * 1024), 8 * 1024 * 1024)

    if block_b is None:
        block_b = _pick_block_b(B, T, D, x.dtype.itemsize, budget)

    grid_b = pl.cdiv(B, block_b)
    b_pad = grid_b * block_b
    if b_pad != B:
        # Zero-pad the batch so every grid step sees a full tile (padded rows
        # produce finite garbage that is sliced away below).
        x = jnp.pad(x, ((0, b_pad - B), (0, 0), (0, 0)))

    # Explicit VMEM limit: double-buffered input + intermediates + output.
    x_tile = block_b * T * D * x.dtype.itemsize
    o_tile = block_b * D * x.dtype.itemsize
    vmem_limit = int(min(max(4 * x_tile + 4 * o_tile + (2 << 20), 16 << 20),
                         64 << 20))

    out = pl.pallas_call(
        _sap_kernel,
        out_shape=jax.ShapeDtypeStruct((b_pad, D), x.dtype),
        grid=(grid_b,),
        in_specs=[
            pl.BlockSpec((block_b, T, D), lambda i: (i, 0, 0)),
            pl.BlockSpec((1, D), lambda i: (0, 0)),
        ],
        out_specs=pl.BlockSpec((block_b, D), lambda i: (i, 0)),
        compiler_params=pltpu.CompilerParams(
            dimension_semantics=("parallel",),
            vmem_limit_bytes=vmem_limit),
    )(x, w)

    return out[:B] if b_pad != B else out


# ---------------- pure-JAX reference (mirrors the PyTorch forward) -----------
def reference(x, w, b):
    logits = jnp.einsum('btd,od->bto', x, w) + b             # (B, T, 1)
    attn = jax.nn.softmax(logits[..., 0], axis=-1)[..., None]
    return jnp.sum(x * attn, axis=1)                         # (B, D)


def _run_case(key, B, T, D):
    kx, kw, kb = jax.random.split(key, 3)
    x = jax.random.normal(kx, (B, T, D), dtype=jnp.float32)
    # nn.Linear(D, 1) default init: U(-1/sqrt(D), 1/sqrt(D)); weight (1,D), bias (1,)
    bound = 1.0 / math.sqrt(D)
    w = jax.random.uniform(kw, (1, D), jnp.float32, -bound, bound)
    b = jax.random.uniform(kb, (1,), jnp.float32, -bound, bound)

    out = jax.block_until_ready(self_attention_pooling(x, w, b))
    ref = jax.block_until_ready(reference(x, w, b))

    assert out.shape == (B, D)
    assert jnp.allclose(out, ref, atol=2e-3, rtol=2e-3), \
        f"B={B} T={T} D={D}: max abs err = {jnp.max(jnp.abs(out - ref))}"


if __name__ == "__main__":
    key = jax.random.PRNGKey(0)
    k1, k2 = jax.random.split(key)

    # Small demo shape (single tile, single grid step).
    _run_case(k1, B=2, T=8, D=32)
    # Larger, non-divisible batch: exercises sublane-aligned block folding,
    # batch padding, and the multi-step "parallel" grid.
    _run_case(k2, B=20, T=8, D=32)

    print("KERNEL_OK")
</pallas_src>

<mosaic_0001>
module attributes {stable_mosaic.version = 11 : i64} {
  func.func @_sap_kernel(%arg0: i32, %arg1: memref<2x8x32xf32, #tpu.memory_space<vmem>>, %arg2: memref<1x32xf32, #tpu.memory_space<vmem>>, %arg3: memref<2x32xf32, #tpu.memory_space<vmem>>) attributes {dimension_semantics = [#tpu.dimension_semantics<parallel>], iteration_bounds = array<i64: 1>, scalar_prefetch = 0 : i64, scratch_operands = 0 : i64, tpu.core_type = #tpu.core_type<tc>, window_params = [{transform_indices = @transform_0, window_bounds = array<i64: 2, 8, 32>}, {pipeline_mode = #tpu.pipeline_mode<synchronous>, transform_indices = @transform_1, window_bounds = array<i64: 1, 32>}, {transform_indices = @transform_2, window_bounds = array<i64: 2, 32>}]} {
    %c0 = arith.constant 0 : index
    %c0_0 = arith.constant 0 : index
    %c0_1 = arith.constant 0 : index
    %0 = vector.load %arg1[%c0, %c0_0, %c0_1] : memref<2x8x32xf32, #tpu.memory_space<vmem>>, vector<2x8x32xf32>
    %c0_2 = arith.constant 0 : index
    %c0_3 = arith.constant 0 : index
    %1 = vector.load %arg2[%c0_2, %c0_3] : memref<1x32xf32, #tpu.memory_space<vmem>>, vector<1x32xf32>
    %2 = vector.shape_cast %1 : vector<1x32xf32> to vector<1x1x32xf32>
    %3 = vector.broadcast %2 : vector<1x1x32xf32> to vector<2x8x32xf32>
    %4 = arith.mulf %0, %3 : vector<2x8x32xf32>
    %cst = arith.constant dense<0.000000e+00> : vector<2x8xf32>
    %5 = vector.multi_reduction <add>, %4, %cst [2] : vector<2x8x32xf32> to vector<2x8xf32>
    %cst_4 = arith.constant dense<0xFF800000> : vector<2xf32>
    %6 = vector.multi_reduction <maximumf>, %5, %cst_4 [1] : vector<2x8xf32> to vector<2xf32>
    %7 = vector.shape_cast %6 : vector<2xf32> to vector<2x1xf32>
    %8 = vector.broadcast %7 : vector<2x1xf32> to vector<2x8xf32>
    %9 = arith.subf %5, %8 : vector<2x8xf32>
    %10 = math.exp %9 : vector<2x8xf32>
    %cst_5 = arith.constant dense<0.000000e+00> : vector<2xf32>
    %11 = vector.multi_reduction <add>, %10, %cst_5 [1] : vector<2x8xf32> to vector<2xf32>
    %12 = vector.shape_cast %11 : vector<2xf32> to vector<2x1xf32>
    %13 = tpu.reciprocal %12 {approx = true} : vector<2x1xf32> -> vector<2x1xf32>
    %14 = vector.broadcast %13 : vector<2x1xf32> to vector<2x8xf32>
    %15 = arith.mulf %10, %14 : vector<2x8xf32>
    %16 = vector.shape_cast %15 : vector<2x8xf32> to vector<2x1x8xf32>
    "tpu.trace_start"() <{level = 10 : i32, message = "bqt,btd->bqd"}> : () -> ()
    %cst_6 = arith.constant dense<0.000000e+00> : vector<2x1x32xf32>
    %17 = tpu.matmul %16, %0, %cst_6 {dimension_numbers = #tpu.dot_dimension_numbers<[2], [1], [1], [2], [0, 0, 0, 1, 1, 2], [0], [0]>} : vector<2x1x8xf32>, vector<2x8x32xf32>, vector<2x1x32xf32> -> vector<2x1x32xf32>
    "tpu.trace_stop"() : () -> ()
    %18 = vector.shape_cast %17 : vector<2x1x32xf32> to vector<2x32xf32>
    %c0_7 = arith.constant 0 : index
    %c0_8 = arith.constant 0 : index
    %19 = vector.load %arg3[%c0_7, %c0_8] : memref<2x32xf32, #tpu.memory_space<vmem>>, vector<2x32xf32>
    tpu.vector_store %arg3[%c0_7, %c0_8], %18 {strides = array<i32>} : memref<2x32xf32, #tpu.memory_space<vmem>>, vector<2x32xf32>,
    return
  }
  func.func @transform_0(%arg0: i32) -> (i32, i32, i32) {
    %c0_i32 = arith.constant 0 : i32
    %c0_i32_0 = arith.constant 0 : i32
    %c0_i32_1 = arith.constant 0 : i32
    return %arg0, %c0_i32, %c0_i32_0 : i32, i32, i32
  }
  func.func @transform_1(%arg0: i32) -> (i32, i32) {
    %c0_i32 = arith.constant 0 : i32
    %c0_i32_0 = arith.constant 0 : i32
    %c0_i32_1 = arith.constant 0 : i32
    return %c0_i32, %c0_i32_0 : i32, i32
  }
  func.func @transform_2(%arg0: i32) -> (i32, i32) {
    %c0_i32 = arith.constant 0 : i32
    %c0_i32_0 = arith.constant 0 : i32
    return %arg0, %c0_i32 : i32, i32
  }
}

</mosaic_0001>

<llo_original>
// kernel: tpu_custom_call.1
$region0: #{tpu_custom_call.1}
  #allocation0 [shape = 'u32[]', space=smem, size = 0x4, offset = 0x4, fixed_abs, tag = 'smem constant byte address 0x4 - core index']
  #allocation1 [shape = 'u32[144,128]{1,0:T(1,128)}', space=vmem, size = 0x12000, scoped, tag = 'internal scratch']
  %s0 = inlined_call_operand.hbm [shape: f32[2,8,32], index: 0, kind: input, shape index: {}]
  %s1 = inlined_call_operand.vmem [shape: f32[1,32], index: 1, kind: input, shape index: {}]
  %s2 = inlined_call_operand.hbm [shape: f32[2,32], index: 2, kind: output, shape index: {}]
  %s3 = sld [smem:[#allocation0]]
  $region22: #{tpu_custom_call.1} parent=0
    _
  %s5 = ssub.s32 1, %s3
  %s6 = scalar_select 0, %s5, %s3
  $region1: #{tpu_custom_call.1} parent=0
    #allocation2 [shape = 'u8[8192]{0}', space=vmem, size = 0x2000, scoped, tag = 'input window, operand 0, single buffered']
    #allocation3 [shape = 's32[1]{0}', space=sflag, size = 0x4, scoped, tag = 'scoped memory for tpu_custom_call.1']
    #allocation4 [shape = 's32[1]{0}', space=sflag, size = 0x4, scoped, tag = 'scoped memory for tpu_custom_call.1']
    #allocation5 [shape = 'u8[1024]{0}', space=vmem, size = 0x400, scoped, tag = 'output window, operand 0, single buffered']
    %7 = vsyncpa [#allocation3], 0
    %8 = vsyncpa [#allocation4], 0
    // Predicated region
    $region2: #{tpu_custom_call.1} parent=1 // pred_check
      _
    $region3: #{tpu_custom_call.1} parent=1 // pred_check_branch
      %10 = sbr.rel (0) target = $region5
    $region4: #{tpu_custom_call.1} parent=1 // pred_region
      %s12 = ssub.s32 256, 256
      %13 = vsyncadd [#allocation3], %s12
      %s14 = sshll.u32 [#allocation2], 4
      %s15 = int_to_ptr.vmem [resolvable:$true] %s14
      %20 = dma.hbm_to_vmem [thread:$0]  %s0, 256, %s15, [#allocation3], 128, 128, 8
    $region5: #{tpu_custom_call.1} parent=1 // pred_fallthru
      _
    // Predicated region
    $region6: #{tpu_custom_call.1} parent=1 // pred_check
      _
    $region7: #{tpu_custom_call.1} parent=1 // pred_check_branch
      %22 = sbr.rel (0) target = $region9
    $region8: #{tpu_custom_call.1} parent=1 // pred_region
      _
    $region9: #{tpu_custom_call.1} parent=1 // pred_fallthru
      _
    // Predicated region
    $region10: #{tpu_custom_call.1} parent=1 // pred_check
      _
    $region11: #{tpu_custom_call.1} parent=1 // pred_check_branch
      %24 = sbr.rel (0) target = $region13
    $region12: #{tpu_custom_call.1} parent=1 // pred_region
      %25 = dma.done [#allocation3], 256
    $region13: #{tpu_custom_call.1} parent=1 // pred_fallthru
      _
    %v26 = vld [vmem:[#allocation2] sm:$0xff]
    %v27 = vld [vmem:[#allocation2 + $0x8] sm:$0xff]
    %v28 = vld [vmem:[%s1] sm:$0x1]
    %v30 = vlaneseq
    %v31 = vshrl.u32 %v30, 7
    %v32 = vsub.s32 0, %v31
    %v33 = vrot.slane %v28, %v32
    %v35 = vmul.f32 %v26, %v33
    %v36 = vmul.f32 %v27, %v33
    %vm37 = vcmask 261120
    %v38 = vsel %vm37, %v35, 0.0
    %39 = vadd.xlane.f32.xlu0 %v38
    %v40 = vpop.xlane.xlu0 %39
    %v41 = vsel %vm37, %v36, 0.0
    %42 = vadd.xlane.f32.xlu0 %v41
    %v43 = vpop.xlane.xlu0 %42
    %v46 = vlaneseq
    %v47 = vand.u32 %v46, 127
    %v48 = vlaneseq
    %v49 = vshrl.u32 %v48, 7
    %v50 = vsub.s32 %v47, %v49
    %v51 = vrot.slane %v40, %v50
    %v52 = vlaneseq
    %v53 = vshrl.u32 %v52, 7
    %v54 = vsub.s32 %v47, %v53
    %v55 = vrot.slane %v43, %v54
    %vm56 = vcmask 1041409
    %v57 = vsel %vm56, %v55, %v51
    %vm59 = vcmask 58368
    %v60 = vsel %vm59, %v57, -inf
    %61 = vmax.xlane.f32.xlu0 %v60
    %v62 = vpop.xlane.xlu0 %61
    %v64 = vlaneseq
    %v65 = vshrl.u32 %v64, 7
    %v66 = vsub.s32 0, %v65
    %v67 = vrot.slane %v62, %v66
    %v68 = vlaneseq
    %v69 = vshrl.u32 %v68, 7
    %v70 = vsub.s32 1, %v69
    %v71 = vrot.slane %v62, %v70
    %v74 = vsub.f32 %v40, %v67
    %v75 = vsub.f32 %v43, %v71
    %v76 = vmul.f32 %v74, 1.442695
    %v77 = vpow.pop %v76
    %v78 = vmul.f32 %v75, 1.442695
    %v79 = vpow.pop %v78
    %82 = vset.pattern.permute.xlu0 0
    %83 = vperm.xlu0 %82, %v77
    %v84 = vpop.permute.xlu0 %83
    %85 = vset.pattern.permute.xlu0 0
    %86 = vperm.xlu0 %85, %v79
    %v87 = vpop.permute.xlu0 %86
    %v88 = vlaneseq
    %v89 = vshrl.u32 %v88, 7
    %v90 = vsub.s32 %v47, %v89
    %v91 = vrot.slane %v84, %v90
    %v92 = vlaneseq
    %v93 = vshrl.u32 %v92, 7
    %v94 = vsub.s32 %v47, %v93
    %v95 = vrot.slane %v87, %v94
    %v96 = vsel %vm56, %v95, %v91
    %v98 = vsel %vm59, %v96, 0.0
    %99 = vadd.xlane.f32.xlu0 %v98
    %v100 = vpop.xlane.xlu0 %99
    %v101 = vrcp.pop %v100
    %v103 = vlaneseq
    %v104 = vshrl.u32 %v103, 7
    %v105 = vsub.s32 0, %v104
    %v106 = vrot.slane %v101, %v105
    %v107 = vlaneseq
    %v108 = vshrl.u32 %v107, 7
    %v109 = vsub.s32 1, %v108
    %v110 = vrot.slane %v101, %v109
    %v113 = vmul.f32 %v77, %v106
    %v114 = vmul.f32 %v79, %v110
    %116 = vset.pattern.permute.xlu0 0
    %117 = vperm.xlu0 %116, %v113
    %v118 = vpop.permute.xlu0 %117
    %v119 = vlaneseq
    %v120 = vshrl.u32 %v119, 7
    %v121 = vsub.s32 %v47, %v120
    %v122 = vrot.slane %v118, %v121
    %vm123 = vcmask 64512
    %v124 = vsel %vm123, %v122, 0
    %126 = vmatprep.subr.mxu0 0.0
    %127 = vmatpush1.msra.mxu0 %v26
    %128 = vmatprep.subr.mxu0 0.0
    %129 = vmatpush1.msra.mxu0 0.0
    %130 = vmatprep.subr.mxu0 0.0
    %131 = vmatpush1.msra.mxu0 0.0
    %132 = vmatprep.subr.mxu0 0.0
    %133 = vmatpush1.msra.mxu0 0.0
    %134 = vmatprep.subr.mxu0 0.0
    %135 = vmatpush1.msra.mxu0 0.0
    %136 = vmatprep.subr.mxu0 0.0
    %137 = vmatpush1.msra.mxu0 0.0
    %138 = vmatprep.subr.mxu0 0.0
    %139 = vmatpush1.msra.mxu0 0.0
    %140 = vmatprep.subr.mxu0 0.0
    %141 = vmatpush1.msra.mxu0 0.0
    %142 = vmatprep.subr.mxu0 0.0
    %143 = vmatpush1.msra.mxu0 0.0
    %144 = vmatprep.subr.mxu0 0.0
    %145 = vmatpush1.msra.mxu0 0.0
    %146 = vmatprep.subr.mxu0 0.0
    %147 = vmatpush1.msra.mxu0 0.0
    %148 = vmatprep.subr.mxu0 0.0
    %149 = vmatpush1.msra.mxu0 0.0
    %150 = vmatprep.subr.mxu0 0.0
    %151 = vmatpush1.msra.mxu0 0.0
    %152 = vmatprep.subr.mxu0 0.0
    %153 = vmatpush1.msra.mxu0 0.0
    %154 = vmatprep.subr.mxu0 0.0
    %155 = vmatpush1.msra.mxu0 0.0
    %156 = vmatprep.subr.mxu0 0.0
    %157 = vmatpush1.msra.mxu0 0.0
    %158 = vmatprep.subr.mxu0 0.0
    %159 = vmatpush1.msra.mxu0 0.0
    %160 = vmatprep.subr.mxu0 0.0
    %161 = vmatpush1.msra.mxu0 0.0
    %162 = vmatprep.subr.mxu0 0.0
    %163 = vmatpush1.msra.mxu0 0.0
    %164 = vmatprep.subr.mxu0 0.0
    %165 = vmatpush1.msra.mxu0 0.0
    %166 = vmatprep.subr.mxu0 0.0
    %167 = vmatpush1.msra.mxu0 0.0
    %168 = vmatprep.subr.mxu0 0.0
    %169 = vmatpush1.msra.mxu0 0.0
    %170 = vmatprep.subr.mxu0 0.0
    %171 = vmatpush1.msra.mxu0 0.0
    %172 = vmatprep.subr.mxu0 0.0
    %173 = vmatpush1.msra.mxu0 0.0
    %174 = vmatprep.subr.mxu0 0.0
    %175 = vmatpush1.msra.mxu0 0.0
    %176 = vmatprep.subr.mxu0 0.0
    %177 = vmatpush1.msra.mxu0 0.0
    %178 = vmatprep.subr.mxu0 0.0
    %179 = vmatpush1.msra.mxu0 0.0
    %180 = vmatprep.subr.mxu0 0.0
    %181 = vmatpush1.msra.mxu0 0.0
    %182 = vmatprep.subr.mxu0 0.0
    %183 = vmatpush1.msra.mxu0 0.0
    %184 = vmatprep.subr.mxu0 0.0
    %185 = vmatpush1.msra.mxu0 0.0
    %186 = vmatprep.subr.mxu0 0.0
    %187 = vmatpush1.msra.mxu0 0.0
    %188 = vmatprep.subr.mxu0 0.0
    %189 = vmatpush1.msra.mxu0 0.0
    %190 = vmatprep.mubr.f32.mxu0 0.0
    %191 = vmatmul.mubr.f32.gmra.mrb[0].mxu0 %v124
    %v192 = vpop.f32.mrb[0].mxu0
    %v193 = vadd.f32 0.0, %v192
    %v194 = vpop.f32.mrb[0].mxu0
    %195 = vdwg.mxu0
    %197 = vset.pattern.permute.xlu0 0
    %198 = vperm.xlu0 %197, %v114
    %v199 = vpop.permute.xlu0 %198
    %v200 = vlaneseq
    %v201 = vshrl.u32 %v200, 7
    %v202 = vsub.s32 %v47, %v201
    %v203 = vrot.slane %v199, %v202
    %v204 = vsel %vm123, %v203, 0
    %206 = vmatprep.subr.mxu0 0.0
    %207 = vmatpush1.msra.mxu0 %v27
    %208 = vmatprep.subr.mxu0 0.0
    %209 = vmatpush1.msra.mxu0 0.0
    %210 = vmatprep.subr.mxu0 0.0
    %211 = vmatpush1.msra.mxu0 0.0
    %212 = vmatprep.subr.mxu0 0.0
    %213 = vmatpush1.msra.mxu0 0.0
    %214 = vmatprep.subr.mxu0 0.0
    %215 = vmatpush1.msra.mxu0 0.0
    %216 = vmatprep.subr.mxu0 0.0
    %217 = vmatpush1.msra.mxu0 0.0
    %218 = vmatprep.subr.mxu0 0.0
    %219 = vmatpush1.msra.mxu0 0.0
    %220 = vmatprep.subr.mxu0 0.0
    %221 = vmatpush1.msra.mxu0 0.0
    %222 = vmatprep.subr.mxu0 0.0
    %223 = vmatpush1.msra.mxu0 0.0
    %224 = vmatprep.subr.mxu0 0.0
    %225 = vmatpush1.msra.mxu0 0.0
    %226 = vmatprep.subr.mxu0 0.0
    %227 = vmatpush1.msra.mxu0 0.0
    %228 = vmatprep.subr.mxu0 0.0
    %229 = vmatpush1.msra.mxu0 0.0
    %230 = vmatprep.subr.mxu0 0.0
    %231 = vmatpush1.msra.mxu0 0.0
    %232 = vmatprep.subr.mxu0 0.0
    %233 = vmatpush1.msra.mxu0 0.0
    %234 = vmatprep.subr.mxu0 0.0
    %235 = vmatpush1.msra.mxu0 0.0
    %236 = vmatprep.subr.mxu0 0.0
    %237 = vmatpush1.msra.mxu0 0.0
    %238 = vmatprep.subr.mxu0 0.0
    %239 = vmatpush1.msra.mxu0 0.0
    %240 = vmatprep.subr.mxu0 0.0
    %241 = vmatpush1.msra.mxu0 0.0
    %242 = vmatprep.subr.mxu0 0.0
    %243 = vmatpush1.msra.mxu0 0.0
    %244 = vmatprep.subr.mxu0 0.0
    %245 = vmatpush1.msra.mxu0 0.0
    %246 = vmatprep.subr.mxu0 0.0
    %247 = vmatpush1.msra.mxu0 0.0
    %248 = vmatprep.subr.mxu0 0.0
    %249 = vmatpush1.msra.mxu0 0.0
    %250 = vmatprep.subr.mxu0 0.0
    %251 = vmatpush1.msra.mxu0 0.0
    %252 = vmatprep.subr.mxu0 0.0
    %253 = vmatpush1.msra.mxu0 0.0
    %254 = vmatprep.subr.mxu0 0.0
    %255 = vmatpush1.msra.mxu0 0.0
    %256 = vmatprep.subr.mxu0 0.0
    %257 = vmatpush1.msra.mxu0 0.0
    %258 = vmatprep.subr.mxu0 0.0
    %259 = vmatpush1.msra.mxu0 0.0
    %260 = vmatprep.subr.mxu0 0.0
    %261 = vmatpush1.msra.mxu0 0.0
    %262 = vmatprep.subr.mxu0 0.0
    %263 = vmatpush1.msra.mxu0 0.0
    %264 = vmatprep.subr.mxu0 0.0
    %265 = vmatpush1.msra.mxu0 0.0
    %266 = vmatprep.subr.mxu0 0.0
    %267 = vmatpush1.msra.mxu0 0.0
    %268 = vmatprep.subr.mxu0 0.0
    %269 = vmatpush1.msra.mxu0 0.0
    %270 = vmatprep.mubr.f32.mxu0 0.0
    %271 = vmatmul.mubr.f32.gmra.mrb[0].mxu0 %v204
    %v272 = vpop.f32.mrb[0].mxu0
    %v273 = vadd.f32 0.0, %v272
    %v274 = vpop.f32.mrb[0].mxu0
    %275 = vdwg.mxu0
    %v278 = vrot.slane %v273, 7
    %v279 = vsel %vm56, %v278, %v193
    %vm281 = vcmask 254976
    %282 = vst.msk [vmem:[#allocation5] sm:$0x3] %vm281, %v279
    // Predicated region
    $region14: #{tpu_custom_call.1} parent=1 // pred_check
      _
    $region15: #{tpu_custom_call.1} parent=1 // pred_check_branch
      %284 = sbr.rel (0) target = $region17
    $region16: #{tpu_custom_call.1} parent=1 // pred_region
      %s286 = ssub.s32 32, 32
      %287 = vsyncadd [#allocation4], %s286
      %s289 = sshll.u32 [#allocation5], 4
      %s290 = int_to_ptr.vmem [resolvable:$true] %s289
      %292 = dma.vmem_to_hbm [thread:$0]  %s290, 32, %s2, [#allocation4]
    $region17: #{tpu_custom_call.1} parent=1 // pred_fallthru
      _
    // Predicated region
    $region18: #{tpu_custom_call.1} parent=1 // pred_check
      _
    $region19: #{tpu_custom_call.1} parent=1 // pred_check_branch
      %294 = sbr.rel (0) target = $region21
    $region20: #{tpu_custom_call.1} parent=1 // pred_region
      %295 = dma.done [#allocation4], 32
    $region21: #{tpu_custom_call.1} parent=1 // pred_fallthru
      _
    %296 = vsyncpa [#allocation3], 1
    %297 = vsyncpa [#allocation4], 1

</llo_original>
